<compile_context>
chip_gen: v7x
topology: tpu7x:2x2x1
jax: 0.10.0
libtpu: 0.0.40
codegen_flags: <defaults>
</compile_context>

<pallas_src>
import functools

import jax
import jax.numpy as jnp
from jax.experimental import pallas as pl
from jax.experimental.pallas import tpu as pltpu

LN_EPS = 1e-5


def _round_up(a, m):
    return ((a + m - 1) // m) * m


def _phys_vmem_bytes():
    """Per-core VMEM capacity; conservative fallback if the query is unavailable."""
    try:
        info = pltpu.get_tpu_info()
        v = getattr(info, "vmem_capacity_bytes", None)
        if v:
            return int(v)
    except Exception:
        pass
    return 64 * 1024 * 1024  # v7x per-TC size: safe lower bound everywhere


def _pick_f_chunk(ffn_inner, target):
    """Largest multiple of 128 that divides ffn_inner and is <= max(target, 128)."""
    if ffn_inner % 128 != 0:
        return ffn_inner
    best = 128
    c = 128
    while c <= ffn_inner:
        if ffn_inner % c == 0 and c <= max(target, 128):
            best = c
        c += 128
    return best


def _layer_norm_f32(x_f32, gamma_f32, beta_f32):
    # Biased variance, matching torch.nn.LayerNorm.
    mean = jnp.mean(x_f32, axis=-1, keepdims=True)
    xc = x_f32 - mean
    var = jnp.mean(xc * xc, axis=-1, keepdims=True)
    inv = jax.lax.rsqrt(var + LN_EPS)
    return xc * inv * gamma_f32 + beta_f32


def _ff_kernel_resident(x_ref, w1_ref, b1_ref, w2_ref, b2_ref, g_ref, bta_ref, o_ref,
                        *, pre_lnorm):
    """Whole-ffn path: W1/W2 fully VMEM-resident, single row-tile grid."""
    x = x_ref[...]                                  # [tile_n, H], native dtype
    x_f32 = x.astype(jnp.float32)
    gamma = g_ref[...].astype(jnp.float32)          # [1, H]
    beta = bta_ref[...].astype(jnp.float32)         # [1, H]

    if pre_lnorm:
        core_in = _layer_norm_f32(x_f32, gamma, beta).astype(w1_ref.dtype)
    else:
        core_in = x

    # Linear -> ReLU -> (Dropout = identity at inference) -> Linear -> (Dropout)
    h = jnp.dot(core_in, w1_ref[...], preferred_element_type=jnp.float32)
    h = jnp.maximum(h + b1_ref[...].astype(jnp.float32), 0.0)
    y = jnp.dot(h.astype(w2_ref.dtype), w2_ref[...], preferred_element_type=jnp.float32)
    y = y + b2_ref[...].astype(jnp.float32)

    out = x_f32 + y
    if not pre_lnorm:
        out = _layer_norm_f32(out, gamma, beta)
    o_ref[...] = out.astype(o_ref.dtype)


def _ff_kernel_fchunk(x_ref, w1_ref, b1_ref, w2_ref, b2_ref, g_ref, bta_ref, o_ref,
                      acc_ref, *, pre_lnorm):
    """Streamed-weights path: trailing 'arbitrary' ffn_inner axis, f32 accumulator."""
    f = pl.program_id(1)
    nf = pl.num_programs(1)

    @pl.when(f == 0)
    def _():
        acc_ref[...] = jnp.zeros_like(acc_ref)

    x = x_ref[...]                                  # [tile_n, H] (resident across f)
    if pre_lnorm:
        gamma = g_ref[...].astype(jnp.float32)
        beta = bta_ref[...].astype(jnp.float32)
        core_in = _layer_norm_f32(x.astype(jnp.float32), gamma, beta).astype(w1_ref.dtype)
    else:
        core_in = x

    # ReLU(x @ W1 + b1) decomposes independently across ffn_inner chunks; the second
    # matmul sums over ffn_inner, accumulated in f32 VMEM.
    h = jnp.dot(core_in, w1_ref[...], preferred_element_type=jnp.float32)
    h = jnp.maximum(h + b1_ref[...].astype(jnp.float32), 0.0)
    acc_ref[...] += jnp.dot(h.astype(w2_ref.dtype), w2_ref[...],
                            preferred_element_type=jnp.float32)

    @pl.when(f == nf - 1)
    def _():
        x_f32 = x_ref[...].astype(jnp.float32)
        out = x_f32 + acc_ref[...] + b2_ref[...].astype(jnp.float32)
        if not pre_lnorm:
            gamma = g_ref[...].astype(jnp.float32)
            beta = bta_ref[...].astype(jnp.float32)
            out = _layer_norm_f32(out, gamma, beta)
        o_ref[...] = out.astype(o_ref.dtype)


def position_wise_ff(x, w1, b1, w2, b2, gamma, beta, *, pre_lnorm=False,
                     tile_n=None, ffn_chunk=None):
    """x: (seq, batch, hidden).  Weights follow y = x @ W + b convention
    (W1: (hidden, ffn_inner), W2: (ffn_inner, hidden)).

    tile_n:    row tile (tokens per grid step); None = derive from VMEM size.
    ffn_chunk: None = auto (stream weights only when they do not fit comfortably in
               VMEM); int forces the F-chunked path with that chunk size.
    """
    seq, bsz, hidden = x.shape
    ffn_inner = w1.shape[1]
    n = seq * bsz

    # bf16 activations with f32 weights: cast weights (f32 path costs ~3x MXU passes and
    # doubles resident-weight VMEM; accumulation is f32 anyway).
    if x.dtype == jnp.bfloat16:
        if w1.dtype == jnp.float32:
            w1 = w1.astype(jnp.bfloat16)
        if w2.dtype == jnp.float32:
            w2 = w2.astype(jnp.bfloat16)

    phys = _phys_vmem_bytes()
    cap = (phys * 3) // 4                     # leave >= 1/4 of VMEM for Mosaic scratch

    act_b = x.dtype.itemsize
    w_b = w1.dtype.itemsize
    pack = {4: 8, 2: 16, 1: 32}.get(act_b, 8)     # sublane packing for this dtype

    # Row tile: fill MXU sublanes, re-derived from the per-core VMEM budget.
    if tile_n is None:
        tile_n = 256 if phys <= 64 * 1024 * 1024 else 512
    tile_n = max(pack, min(_round_up(tile_n, pack), _round_up(n, pack)))
    # Guarantee >= 2 row steps when there is enough work so both v7x TCs are fed.
    if pl.cdiv(n, tile_n) < 2 and n > pack:
        tile_n = max(pack, _round_up(pl.cdiv(n, 2), pack))
    grid_rows = pl.cdiv(n, tile_n)            # no wrapper pad; last block store is masked

    x2d = x.reshape(n, hidden)
    b1_2d = b1.reshape(1, ffn_inner)
    b2_2d = b2.reshape(1, hidden)
    g_2d = gamma.reshape(1, hidden)
    bt_2d = beta.reshape(1, hidden)

    # Decide resident vs streamed weights.
    w_bytes = 2 * hidden * ffn_inner * w_b
    if ffn_chunk is not None:
        assert ffn_inner % ffn_chunk == 0 and (ffn_chunk % 128 == 0 or ffn_chunk == ffn_inner), \
            "ffn_chunk must divide ffn_inner and be a multiple of 128 (or the full dim)"
        f_chunk = ffn_chunk
    elif w_bytes > phys // 2 and ffn_inner % 128 == 0:
        # Target ~phys/4 for the double-buffered W1+W2 slabs.
        f_chunk = _pick_f_chunk(ffn_inner, (phys // 4) // max(1, 4 * hidden * w_b))
    else:
        f_chunk = ffn_inner

    if f_chunk >= ffn_inner:
        # ------------------------- resident-weight path -------------------------
        kernel = functools.partial(_ff_kernel_resident, pre_lnorm=pre_lnorm)
        est = (2 * 2 * tile_n * hidden * act_b            # x in + out, double-buffered
               + 2 * hidden * ffn_inner * w_b             # W1 + W2, single buffer (Buffered(1))
               + tile_n * (ffn_inner + 2 * hidden) * 4    # f32 h / x_f32 / out intermediates
               + (ffn_inner + 3 * hidden) * 4)            # biases / LN params
        grid_spec = pltpu.PrefetchScalarGridSpec(
            num_scalar_prefetch=0,
            grid=(grid_rows,),
            in_specs=[
                pl.BlockSpec((tile_n, hidden), lambda i: (i, 0)),                  # x rows
                pl.BlockSpec((hidden, ffn_inner), lambda i: (0, 0),
                             pipeline_mode=pl.Buffered(1)),                        # W1
                pl.BlockSpec((1, ffn_inner), lambda i: (0, 0),
                             pipeline_mode=pl.Buffered(1)),                        # b1
                pl.BlockSpec((ffn_inner, hidden), lambda i: (0, 0),
                             pipeline_mode=pl.Buffered(1)),                        # W2
                pl.BlockSpec((1, hidden), lambda i: (0, 0),
                             pipeline_mode=pl.Buffered(1)),                        # b2
                pl.BlockSpec((1, hidden), lambda i: (0, 0),
                             pipeline_mode=pl.Buffered(1)),                        # gamma
                pl.BlockSpec((1, hidden), lambda i: (0, 0),
                             pipeline_mode=pl.Buffered(1)),                        # beta
            ],
            out_specs=pl.BlockSpec((tile_n, hidden), lambda i: (i, 0)),
        )
        dim_sem = ("parallel",)
        scratch = []
    else:
        # ------------------------- streamed-weights (F-chunked) path -------------
        kernel = functools.partial(_ff_kernel_fchunk, pre_lnorm=pre_lnorm)
        n_f = ffn_inner // f_chunk
        est = (2 * 2 * tile_n * hidden * act_b            # x + out, double-buffered
               + 2 * 2 * hidden * f_chunk * w_b           # W1 + W2 slabs, double-buffered
               + 2 * f_chunk * 4                          # b1 slab
               + tile_n * hidden * 4                      # f32 accumulator scratch
               + tile_n * (f_chunk + 2 * hidden) * 4      # f32 intermediates
               + 3 * hidden * 4)
        grid_spec = pltpu.PrefetchScalarGridSpec(
            num_scalar_prefetch=0,
            grid=(grid_rows, n_f),
            in_specs=[
                pl.BlockSpec((tile_n, hidden), lambda i, f: (i, 0)),               # x rows
                pl.BlockSpec((hidden, f_chunk), lambda i, f: (0, f)),              # W1 slab
                pl.BlockSpec((1, f_chunk), lambda i, f: (0, f)),                   # b1 slab
                pl.BlockSpec((f_chunk, hidden), lambda i, f: (f, 0)),              # W2 slab
                pl.BlockSpec((1, hidden), lambda i, f: (0, 0),
                             pipeline_mode=pl.Buffered(1)),                        # b2
                pl.BlockSpec((1, hidden), lambda i, f: (0, 0),
                             pipeline_mode=pl.Buffered(1)),                        # gamma
                pl.BlockSpec((1, hidden), lambda i, f: (0, 0),
                             pipeline_mode=pl.Buffered(1)),                        # beta
            ],
            out_specs=pl.BlockSpec((tile_n, hidden), lambda i, f: (i, 0)),
            scratch_shapes=[pltpu.VMEM((tile_n, hidden), jnp.float32)],
        )
        dim_sem = ("parallel", "arbitrary")
        scratch = None  # carried via grid_spec

    # Always set the scoped-VMEM limit explicitly (v5e's default is only 16 MiB) and
    # cap it at 3/4 of physical per-core VMEM (v7x: 48 MiB of 64 MiB).
    vmem_limit = int(min(cap, max(32 * 1024 * 1024, (est * 3) // 2)))

    out2d = pl.pallas_call(
        kernel,
        out_shape=jax.ShapeDtypeStruct((n, hidden), x.dtype),
        grid_spec=grid_spec,
        compiler_params=pltpu.CompilerParams(
            dimension_semantics=dim_sem,
            vmem_limit_bytes=vmem_limit),
    )(x2d, w1, b1_2d, w2, b2_2d, g_2d, bt_2d)

    return out2d.reshape(seq, bsz, hidden)


def _reference(x, w1, b1, w2, b2, gamma, beta, pre_lnorm):
    def ln(v):
        m = jnp.mean(v, axis=-1, keepdims=True)
        var = jnp.mean((v - m) ** 2, axis=-1, keepdims=True)
        return (v - m) / jnp.sqrt(var + LN_EPS) * gamma + beta
    core_in = ln(x) if pre_lnorm else x
    y = jnp.maximum(core_in @ w1 + b1, 0.0) @ w2 + b2
    out = x + y
    return out if pre_lnorm else ln(out)


if __name__ == "__main__":
    key = jax.random.PRNGKey(0)
    kx, k1, k2, k3, k4, k5 = jax.random.split(key, 6)

    def make_params(hidden, ffn_inner):
        # Deterministic synthetic parameters (shapes follow nn.Linear / nn.LayerNorm).
        bound1 = 1.0 / (hidden ** 0.5)
        bound2 = 1.0 / (ffn_inner ** 0.5)
        w1 = jax.random.uniform(k1, (hidden, ffn_inner), jnp.float32, -bound1, bound1)
        b1 = jax.random.uniform(k2, (ffn_inner,), jnp.float32, -bound1, bound1)
        w2 = jax.random.uniform(k3, (ffn_inner, hidden), jnp.float32, -bound2, bound2)
        b2 = jax.random.uniform(k4, (hidden,), jnp.float32, -bound2, bound2)
        gamma = 1.0 + 0.02 * jax.random.normal(k5, (hidden,), jnp.float32)  # N(1, 0.02)
        beta = jnp.zeros((hidden,), jnp.float32)
        return w1, b1, w2, b2, gamma, beta

    # TODO(synk): dropout is treated as identity (inference mode); training-time RNG masking not implemented.

    # Resident-weight path (f32); second shape has a token count that is not a tile
    # multiple so the masked partial-block store path is exercised.
    hidden, ffn_inner = 32, 64
    w1, b1, w2, b2, gamma, beta = make_params(hidden, ffn_inner)
    for (seq, bsz) in ((8, 2), (5, 3)):
        x = jax.random.normal(kx, (seq, bsz, hidden), dtype=jnp.float32)
        for pre_lnorm in (False, True):
            out = jax.block_until_ready(
                position_wise_ff(x, w1, b1, w2, b2, gamma, beta, pre_lnorm=pre_lnorm))
            ref = _reference(x, w1, b1, w2, b2, gamma, beta, pre_lnorm)
            assert out.shape == (seq, bsz, hidden)
            assert jnp.allclose(out, ref, atol=1e-4, rtol=1e-4), \
                f"mismatch (seq={seq}, bsz={bsz}, pre_lnorm={pre_lnorm})"

    # F-chunked (streamed-weights) path, forced at a small shape with 2 ffn chunks.
    hidden_c, ffn_c = 128, 256
    w1c, b1c, w2c, b2c, gc, btc = make_params(hidden_c, ffn_c)
    xc = jax.random.normal(kx, (8, 2, hidden_c), dtype=jnp.float32)
    for pre_lnorm in (False, True):
        outc = jax.block_until_ready(
            position_wise_ff(xc, w1c, b1c, w2c, b2c, gc, btc,
                             pre_lnorm=pre_lnorm, ffn_chunk=128))
        refc = _reference(xc, w1c, b1c, w2c, b2c, gc, btc, pre_lnorm)
        assert outc.shape == xc.shape
        assert jnp.allclose(outc, refc, atol=1e-4, rtol=1e-4), \
            f"fchunk mismatch (pre_lnorm={pre_lnorm})"

    # bf16 path: wrapper casts f32 weights to bf16, MXU operands native, f32 accumulation.
    xb = jax.random.normal(kx, (8, 2, hidden), dtype=jnp.bfloat16)
    outb = jax.block_until_ready(
        position_wise_ff(xb, w1, b1, w2, b2, gamma, beta, pre_lnorm=False))
    refb = _reference(xb.astype(jnp.float32), w1, b1, w2, b2, gamma, beta, False)
    assert outb.shape == xb.shape
    assert bool(jnp.all(jnp.isfinite(outb.astype(jnp.float32))))
    assert jnp.allclose(outb.astype(jnp.float32), refb, atol=1e-1, rtol=1e-1), "bf16 mismatch"

    print("KERNEL_OK")
</pallas_src>

<mosaic_0001>
module attributes {stable_mosaic.version = 11 : i64} {
  func.func @_ff_kernel_resident(%arg0: i32, %arg1: memref<8x32xf32, #tpu.memory_space<vmem>>, %arg2: memref<32x64xf32, #tpu.memory_space<vmem>>, %arg3: memref<1x64xf32, #tpu.memory_space<vmem>>, %arg4: memref<64x32xf32, #tpu.memory_space<vmem>>, %arg5: memref<1x32xf32, #tpu.memory_space<vmem>>, %arg6: memref<1x32xf32, #tpu.memory_space<vmem>>, %arg7: memref<1x32xf32, #tpu.memory_space<vmem>>, %arg8: memref<8x32xf32, #tpu.memory_space<vmem>>) attributes {dimension_semantics = [#tpu.dimension_semantics<parallel>], iteration_bounds = array<i64: 2>, scalar_prefetch = 0 : i64, scratch_operands = 0 : i64, tpu.core_type = #tpu.core_type<tc>, window_params = [{transform_indices = @transform_0, window_bounds = array<i64: 8, 32>}, {pipeline_mode = #tpu.pipeline_mode<synchronous>, transform_indices = @transform_1, window_bounds = array<i64: 32, 64>}, {pipeline_mode = #tpu.pipeline_mode<synchronous>, transform_indices = @transform_2, window_bounds = array<i64: 1, 64>}, {pipeline_mode = #tpu.pipeline_mode<synchronous>, transform_indices = @transform_3, window_bounds = array<i64: 64, 32>}, {pipeline_mode = #tpu.pipeline_mode<synchronous>, transform_indices = @transform_4, window_bounds = array<i64: 1, 32>}, {pipeline_mode = #tpu.pipeline_mode<synchronous>, transform_indices = @transform_5, window_bounds = array<i64: 1, 32>}, {pipeline_mode = #tpu.pipeline_mode<synchronous>, transform_indices = @transform_6, window_bounds = array<i64: 1, 32>}, {transform_indices = @transform_7, window_bounds = array<i64: 8, 32>}]} {
    %c0 = arith.constant 0 : index
    %c0_0 = arith.constant 0 : index
    %0 = vector.load %arg1[%c0, %c0_0] : memref<8x32xf32, #tpu.memory_space<vmem>>, vector<8x32xf32>
    %c0_1 = arith.constant 0 : index
    %c0_2 = arith.constant 0 : index
    %1 = vector.load %arg6[%c0_1, %c0_2] : memref<1x32xf32, #tpu.memory_space<vmem>>, vector<1x32xf32>
    %c0_3 = arith.constant 0 : index
    %c0_4 = arith.constant 0 : index
    %2 = vector.load %arg7[%c0_3, %c0_4] : memref<1x32xf32, #tpu.memory_space<vmem>>, vector<1x32xf32>
    %c0_5 = arith.constant 0 : index
    %c0_6 = arith.constant 0 : index
    %3 = vector.load %arg2[%c0_5, %c0_6] : memref<32x64xf32, #tpu.memory_space<vmem>>, vector<32x64xf32>
    %cst = arith.constant dense<0.000000e+00> : vector<8x64xf32>
    %4 = tpu.matmul %0, %3, %cst {dimension_numbers = #tpu.dot_dimension_numbers<[1], [0], [0], [1], [0, 0, 1, 1], [], []>} : vector<8x32xf32>, vector<32x64xf32>, vector<8x64xf32> -> vector<8x64xf32>
    %c0_7 = arith.constant 0 : index
    %c0_8 = arith.constant 0 : index
    %5 = vector.load %arg3[%c0_7, %c0_8] : memref<1x64xf32, #tpu.memory_space<vmem>>, vector<1x64xf32>
    %6 = vector.broadcast %5 : vector<1x64xf32> to vector<8x64xf32>
    %7 = arith.addf %4, %6 : vector<8x64xf32>
    %cst_9 = arith.constant 0.000000e+00 : f32
    %8 = vector.broadcast %cst_9 : f32 to vector<8x64xf32>
    %9 = arith.maximumf %7, %8 : vector<8x64xf32>
    %c0_10 = arith.constant 0 : index
    %c0_11 = arith.constant 0 : index
    %10 = vector.load %arg4[%c0_10, %c0_11] : memref<64x32xf32, #tpu.memory_space<vmem>>, vector<64x32xf32>
    %cst_12 = arith.constant dense<0.000000e+00> : vector<8x32xf32>
    %11 = tpu.matmul %9, %10, %cst_12 {dimension_numbers = #tpu.dot_dimension_numbers<[1], [0], [0], [1], [0, 0, 1, 1], [], []>} : vector<8x64xf32>, vector<64x32xf32>, vector<8x32xf32> -> vector<8x32xf32>
    %c0_13 = arith.constant 0 : index
    %c0_14 = arith.constant 0 : index
    %12 = vector.load %arg5[%c0_13, %c0_14] : memref<1x32xf32, #tpu.memory_space<vmem>>, vector<1x32xf32>
    %13 = vector.broadcast %12 : vector<1x32xf32> to vector<8x32xf32>
    %14 = arith.addf %11, %13 : vector<8x32xf32>
    %15 = arith.addf %0, %14 : vector<8x32xf32>
    %cst_15 = arith.constant dense<0.000000e+00> : vector<8xf32>
    %16 = vector.multi_reduction <add>, %15, %cst_15 [1] : vector<8x32xf32> to vector<8xf32>
    %17 = vector.shape_cast %16 : vector<8xf32> to vector<8x1xf32>
    %cst_16 = arith.constant 3.200000e+01 : f32
    %18 = vector.broadcast %cst_16 : f32 to vector<8x1xf32>
    %19 = arith.divf %17, %18 : vector<8x1xf32>
    %20 = vector.broadcast %19 : vector<8x1xf32> to vector<8x32xf32>
    %21 = arith.subf %15, %20 : vector<8x32xf32>
    %22 = arith.mulf %21, %21 : vector<8x32xf32>
    %cst_17 = arith.constant dense<0.000000e+00> : vector<8xf32>
    %23 = vector.multi_reduction <add>, %22, %cst_17 [1] : vector<8x32xf32> to vector<8xf32>
    %24 = vector.shape_cast %23 : vector<8xf32> to vector<8x1xf32>
    %cst_18 = arith.constant 3.200000e+01 : f32
    %25 = vector.broadcast %cst_18 : f32 to vector<8x1xf32>
    %26 = arith.divf %24, %25 : vector<8x1xf32>
    %cst_19 = arith.constant 9.99999974E-6 : f32
    %27 = vector.broadcast %cst_19 : f32 to vector<8x1xf32>
    %28 = arith.addf %26, %27 : vector<8x1xf32>
    %29 = math.rsqrt %28 : vector<8x1xf32>
    %30 = vector.broadcast %29 : vector<8x1xf32> to vector<8x32xf32>
    %31 = arith.mulf %21, %30 : vector<8x32xf32>
    %32 = vector.broadcast %1 : vector<1x32xf32> to vector<8x32xf32>
    %33 = arith.mulf %31, %32 : vector<8x32xf32>
    %34 = vector.broadcast %2 : vector<1x32xf32> to vector<8x32xf32>
    %35 = arith.addf %33, %34 : vector<8x32xf32>
    %c0_20 = arith.constant 0 : index
    %c0_21 = arith.constant 0 : index
    %36 = vector.load %arg8[%c0_20, %c0_21] : memref<8x32xf32, #tpu.memory_space<vmem>>, vector<8x32xf32>
    tpu.vector_store %arg8[%c0_20, %c0_21], %35 {strides = array<i32>} : memref<8x32xf32, #tpu.memory_space<vmem>>, vector<8x32xf32>,
    return
  }
  func.func @transform_0(%arg0: i32) -> (i32, i32) {
    %c0_i32 = arith.constant 0 : i32
    %c0_i32_0 = arith.constant 0 : i32
    return %arg0, %c0_i32 : i32, i32
  }
  func.func @transform_1(%arg0: i32) -> (i32, i32) {
    %c0_i32 = arith.constant 0 : i32
    %c0_i32_0 = arith.constant 0 : i32
    %c0_i32_1 = arith.constant 0 : i32
    return %c0_i32, %c0_i32_0 : i32, i32
  }
  func.func @transform_2(%arg0: i32) -> (i32, i32) {
    %c0_i32 = arith.constant 0 : i32
    %c0_i32_0 = arith.constant 0 : i32
    %c0_i32_1 = arith.constant 0 : i32
    return %c0_i32, %c0_i32_0 : i32, i32
  }
  func.func @transform_3(%arg0: i32) -> (i32, i32) {
    %c0_i32 = arith.constant 0 : i32
    %c0_i32_0 = arith.constant 0 : i32
    %c0_i32_1 = arith.constant 0 : i32
    return %c0_i32, %c0_i32_0 : i32, i32
  }
  func.func @transform_4(%arg0: i32) -> (i32, i32) {
    %c0_i32 = arith.constant 0 : i32
    %c0_i32_0 = arith.constant 0 : i32
    %c0_i32_1 = arith.constant 0 : i32
    return %c0_i32, %c0_i32_0 : i32, i32
  }
  func.func @transform_5(%arg0: i32) -> (i32, i32) {
    %c0_i32 = arith.constant 0 : i32
    %c0_i32_0 = arith.constant 0 : i32
    %c0_i32_1 = arith.constant 0 : i32
    return %c0_i32, %c0_i32_0 : i32, i32
  }
  func.func @transform_6(%arg0: i32) -> (i32, i32) {
    %c0_i32 = arith.constant 0 : i32
    %c0_i32_0 = arith.constant 0 : i32
    %c0_i32_1 = arith.constant 0 : i32
    return %c0_i32, %c0_i32_0 : i32, i32
  }
  func.func @transform_7(%arg0: i32) -> (i32, i32) {
    %c0_i32 = arith.constant 0 : i32
    %c0_i32_0 = arith.constant 0 : i32
    return %arg0, %c0_i32 : i32, i32
  }
}

</mosaic_0001>

<llo_original>
// kernel: tpu_custom_call.1
$region0: #{tpu_custom_call.1}
  #allocation0 [shape = 'u32[]', space=smem, size = 0x4, offset = 0x4, fixed_abs, tag = 'smem constant byte address 0x4 - core index']
  #allocation1 [shape = 'u32[144,128]{1,0:T(1,128)}', space=vmem, size = 0x12000, scoped, tag = 'internal scratch']
  %s0 = inlined_call_operand.vmem [shape: f32[16,32], index: 0, kind: input, shape index: {}]
  %s1 = inlined_call_operand.vmem [shape: f32[32,64], index: 1, kind: input, shape index: {}]
  %s2 = inlined_call_operand.vmem [shape: f32[1,64], index: 2, kind: input, shape index: {}]
  %s3 = inlined_call_operand.vmem [shape: f32[64,32], index: 3, kind: input, shape index: {}]
  %s4 = inlined_call_operand.vmem [shape: f32[1,32], index: 4, kind: input, shape index: {}]
  %s5 = inlined_call_operand.vmem [shape: f32[1,32], index: 5, kind: input, shape index: {}]
  %s6 = inlined_call_operand.vmem [shape: f32[1,32], index: 6, kind: input, shape index: {}]
  %s7 = inlined_call_operand.hbm [shape: f32[16,32], index: 7, kind: output, shape index: {}]
  %s8 = sld [smem:[#allocation0]]
  $region61: #{tpu_custom_call.1} parent=0
    _
  %s10 = ssub.s32 1, %s8
  %s11 = scalar_select 0, %s10, %s8
  $region1: #{tpu_custom_call.1} parent=0
    #allocation2 [shape = 'u8[8192]{0}', space=vmem, size = 0x2000, scoped, tag = 'output window, operand 0']
    #allocation3 [shape = 's32[2]{0}', space=sflag, size = 0x8, scoped, tag = 'scoped memory for tpu_custom_call.1']
    %12 = vsyncpa [#allocation3], 0
    %s13 = scalar_lea.sflag [#allocation3], 1
    %14 = vsyncpa %s13, 0
    loop: start=0, step=1, limit=4
    $region2: #{tpu_custom_call.1} parent=1 // loop_pre_header
      _
    $region3: #{tpu_custom_call.1} parent=1 // loop_header
      %s16 = sphi 0, %s20
      %p17 = scmp.ge.s32.totalorder %s16, 4
      %s26 = sphi 0, %s28
      %s29 = sphi 0, %s26
      %s30 = sphi 0, %s29
      %s46 = sphi 0, %s30
      %s50 = sphi 0, %s50
      %s52 = sphi 0, %s50
      %s53 = sphi 0, %s52
      %s67 = sphi 0, %s53
      %s71 = sphi 0, %s71
      %s73 = sphi 0, %s71
      %s74 = sphi 0, %s73
      %s88 = sphi 0, %s74
      %s92 = sphi 0, %s92
      %s94 = sphi 0, %s92
      %s95 = sphi 0, %s94
      %s109 = sphi 0, %s95
      %s113 = sphi 0, %s113
      %s115 = sphi 0, %s113
      %s116 = sphi 0, %s115
      %s130 = sphi 0, %s116
      %s134 = sphi 0, %s134
      %s136 = sphi 0, %s134
      %s137 = sphi 0, %s136
      %s151 = sphi 0, %s137
      %s155 = sphi 0, %s155
      %s157 = sphi 0, %s155
      %s158 = sphi 0, %s157
      %s172 = sphi 0, %s158
      %s178 = sphi 0, %s180
      %s181 = sphi 0, %s178
      %s182 = sphi 0, %s181
      %s198 = sphi 0, %s182
    $region4: #{tpu_custom_call.1} parent=1 // loop_header_branch
      %19 = sbr.rel (%p17) target = $region8
    $region5: #{tpu_custom_call.1} parent=1 // loop_body
      %s21 = ssub.s32 %s16, 1
      %s22 = ssub.s32 %s16, 2
      %s23 = sadd.s32 %s16, 1
      %s24 = ssub.s32 %s16, %s23
      %p25 = scmp.eq.s32.totalorder %s24, 0
      %s27 = sadd.s32 %s26, 1
      %s28 = scalar_select %p25, %s26, %s27
      %p31 = pneg %p25
      %p32 = scmp.eq.s32.totalorder %s16, 1
      %p33 = por %p31, %p32
      %p34 = scmp.ne.s32.totalorder %s26, %s29
      %p35 = scmp.eq.s32.totalorder %s16, 0
      %p36 = por %p34, %p35
      %p37 = scmp.ne.s32.totalorder %s26, %s29
      %p38 = scmp.eq.s32.totalorder %s21, 1
      %p39 = por %p37, %p38
      %p40 = scmp.ne.s32.totalorder %s29, %s30
      %p41 = scmp.eq.s32.totalorder %s21, 0
      %p42 = por %p40, %p41
      %p43 = scmp.ne.s32.totalorder %s29, %s30
      %p44 = scmp.eq.s32.totalorder %s22, 1
      %p45 = por %p43, %p44
      %p47 = scmp.ne.s32.totalorder %s30, %s46
      %p48 = scmp.eq.s32.totalorder %s22, 0
      %p49 = por %p47, %p48
      %s51 = sadd.s32 %s50, 1
      %p54 = scmp.eq.s32.totalorder %s16, 1
      %p55 = scmp.ne.s32.totalorder %s50, %s52
      %p56 = scmp.eq.s32.totalorder %s16, 0
      %p57 = por %p55, %p56
      %p58 = scmp.ne.s32.totalorder %s50, %s52
      %p59 = scmp.eq.s32.totalorder %s21, 1
      %p60 = por %p58, %p59
      %p61 = scmp.ne.s32.totalorder %s52, %s53
      %p62 = scmp.eq.s32.totalorder %s21, 0
      %p63 = por %p61, %p62
      %p64 = scmp.ne.s32.totalorder %s52, %s53
      %p65 = scmp.eq.s32.totalorder %s22, 1
      %p66 = por %p64, %p65
      %p68 = scmp.ne.s32.totalorder %s53, %s67
      %p69 = scmp.eq.s32.totalorder %s22, 0
      %p70 = por %p68, %p69
      %s72 = sadd.s32 %s71, 1
      %p75 = scmp.eq.s32.totalorder %s16, 1
      %p76 = scmp.ne.s32.totalorder %s71, %s73
      %p77 = scmp.eq.s32.totalorder %s16, 0
      %p78 = por %p76, %p77
      %p79 = scmp.ne.s32.totalorder %s71, %s73
      %p80 = scmp.eq.s32.totalorder %s21, 1
      %p81 = por %p79, %p80
      %p82 = scmp.ne.s32.totalorder %s73, %s74
      %p83 = scmp.eq.s32.totalorder %s21, 0
      %p84 = por %p82, %p83
      %p85 = scmp.ne.s32.totalorder %s73, %s74
      %p86 = scmp.eq.s32.totalorder %s22, 1
      %p87 = por %p85, %p86
      %p89 = scmp.ne.s32.totalorder %s74, %s88
      %p90 = scmp.eq.s32.totalorder %s22, 0
      %p91 = por %p89, %p90
      %s93 = sadd.s32 %s92, 1
      %p96 = scmp.eq.s32.totalorder %s16, 1
      %p97 = scmp.ne.s32.totalorder %s92, %s94
      %p98 = scmp.eq.s32.totalorder %s16, 0
      %p99 = por %p97, %p98
      %p100 = scmp.ne.s32.totalorder %s92, %s94
      %p101 = scmp.eq.s32.totalorder %s21, 1
      %p102 = por %p100, %p101
      %p103 = scmp.ne.s32.totalorder %s94, %s95
      %p104 = scmp.eq.s32.totalorder %s21, 0
      %p105 = por %p103, %p104
      %p106 = scmp.ne.s32.totalorder %s94, %s95
      %p107 = scmp.eq.s32.totalorder %s22, 1
      %p108 = por %p106, %p107
      %p110 = scmp.ne.s32.totalorder %s95, %s109
      %p111 = scmp.eq.s32.totalorder %s22, 0
      %p112 = por %p110, %p111
      %s114 = sadd.s32 %s113, 1
      %p117 = scmp.eq.s32.totalorder %s16, 1
      %p118 = scmp.ne.s32.totalorder %s113, %s115
      %p119 = scmp.eq.s32.totalorder %s16, 0
      %p120 = por %p118, %p119
      %p121 = scmp.ne.s32.totalorder %s113, %s115
      %p122 = scmp.eq.s32.totalorder %s21, 1
      %p123 = por %p121, %p122
      %p124 = scmp.ne.s32.totalorder %s115, %s116
      %p125 = scmp.eq.s32.totalorder %s21, 0
      %p126 = por %p124, %p125
      %p127 = scmp.ne.s32.totalorder %s115, %s116
      %p128 = scmp.eq.s32.totalorder %s22, 1
      %p129 = por %p127, %p128
      %p131 = scmp.ne.s32.totalorder %s116, %s130
      %p132 = scmp.eq.s32.totalorder %s22, 0
      %p133 = por %p131, %p132
      %s135 = sadd.s32 %s134, 1
      %p138 = scmp.eq.s32.totalorder %s16, 1
      %p139 = scmp.ne.s32.totalorder %s134, %s136
      %p140 = scmp.eq.s32.totalorder %s16, 0
      %p141 = por %p139, %p140
      %p142 = scmp.ne.s32.totalorder %s134, %s136
      %p143 = scmp.eq.s32.totalorder %s21, 1
      %p144 = por %p142, %p143
      %p145 = scmp.ne.s32.totalorder %s136, %s137
      %p146 = scmp.eq.s32.totalorder %s21, 0
      %p147 = por %p145, %p146
      %p148 = scmp.ne.s32.totalorder %s136, %s137
      %p149 = scmp.eq.s32.totalorder %s22, 1
      %p150 = por %p148, %p149
      %p152 = scmp.ne.s32.totalorder %s137, %s151
      %p153 = scmp.eq.s32.totalorder %s22, 0
      %p154 = por %p152, %p153
      %s156 = sadd.s32 %s155, 1
      %p159 = scmp.eq.s32.totalorder %s16, 1
      %p160 = scmp.ne.s32.totalorder %s155, %s157
      %p161 = scmp.eq.s32.totalorder %s16, 0
      %p162 = por %p160, %p161
      %p163 = scmp.ne.s32.totalorder %s155, %s157
      %p164 = scmp.eq.s32.totalorder %s21, 1
      %p165 = por %p163, %p164
      %p166 = scmp.ne.s32.totalorder %s157, %s158
      %p167 = scmp.eq.s32.totalorder %s21, 0
      %p168 = por %p166, %p167
      %p169 = scmp.ne.s32.totalorder %s157, %s158
      %p170 = scmp.eq.s32.totalorder %s22, 1
      %p171 = por %p169, %p170
      %p173 = scmp.ne.s32.totalorder %s158, %s172
      %p174 = scmp.eq.s32.totalorder %s22, 0
      %p175 = por %p173, %p174
      %s176 = ssub.s32 %s16, %s23
      %p177 = scmp.eq.s32.totalorder %s176, 0
      %s179 = sadd.s32 %s178, 1
      %s180 = scalar_select %p177, %s178, %s179
      %p183 = pneg %p177
      %p184 = scmp.eq.s32.totalorder %s16, 1
      %p185 = por %p183, %p184
      %p186 = scmp.ne.s32.totalorder %s178, %s181
      %p187 = scmp.eq.s32.totalorder %s16, 0
      %p188 = por %p186, %p187
      %p189 = scmp.ne.s32.totalorder %s178, %s181
      %p190 = scmp.eq.s32.totalorder %s21, 1
      %p191 = por %p189, %p190
      %p192 = scmp.ne.s32.totalorder %s181, %s182
      %p193 = scmp.eq.s32.totalorder %s21, 0
      %p194 = por %p192, %p193
      %p195 = scmp.ne.s32.totalorder %s181, %s182
      %p196 = scmp.eq.s32.totalorder %s22, 1
      %p197 = por %p195, %p196
      %p199 = scmp.ne.s32.totalorder %s182, %s198
      %p200 = scmp.eq.s32.totalorder %s22, 0
      %p201 = por %p199, %p200
      %p202 = scmp.le.s32.totalorder 1, %s16
      %p203 = scmp.lt.s32.totalorder %s16, 3
      %p204 = pnand %p202, %p203
      %p205 = pneg %p204
      // Predicated region
      $region9: #{tpu_custom_call.1} parent=5 // pred_check
        _
      $region10: #{tpu_custom_call.1} parent=5 // pred_check_branch
        %207 = sbr.rel (%p204) target = $region12
      $region11: #{tpu_custom_call.1} parent=5 // pred_region
        %s208 = ssub.s32 %s16, 1
        // Predicated region
        $region13: #{tpu_custom_call.1} parent=11 // pred_check
          %p209 = pneg %p63
        $region14: #{tpu_custom_call.1} parent=11 // pred_check_branch
          %211 = sbr.rel (%p209) target = $region16
        $region15: #{tpu_custom_call.1} parent=11 // pred_region
          _
        $region16: #{tpu_custom_call.1} parent=11 // pred_fallthru
          _
        // Predicated region
        $region17: #{tpu_custom_call.1} parent=11 // pred_check
          %p212 = pneg %p84
        $region18: #{tpu_custom_call.1} parent=11 // pred_check_branch
          %214 = sbr.rel (%p212) target = $region20
        $region19: #{tpu_custom_call.1} parent=11 // pred_region
          _
        $region20: #{tpu_custom_call.1} parent=11 // pred_fallthru
          _
        // Predicated region
        $region21: #{tpu_custom_call.1} parent=11 // pred_check
          %p215 = pneg %p105
        $region22: #{tpu_custom_call.1} parent=11 // pred_check_branch
          %217 = sbr.rel (%p215) target = $region24
        $region23: #{tpu_custom_call.1} parent=11 // pred_region
          _
        $region24: #{tpu_custom_call.1} parent=11 // pred_fallthru
          _
        // Predicated region
        $region25: #{tpu_custom_call.1} parent=11 // pred_check
          %p218 = pneg %p126
        $region26: #{tpu_custom_call.1} parent=11 // pred_check_branch
          %220 = sbr.rel (%p218) target = $region28
        $region27: #{tpu_custom_call.1} parent=11 // pred_region
          _
        $region28: #{tpu_custom_call.1} parent=11 // pred_fallthru
          _
        // Predicated region
        $region29: #{tpu_custom_call.1} parent=11 // pred_check
          %p221 = pneg %p147
        $region30: #{tpu_custom_call.1} parent=11 // pred_check_branch
          %223 = sbr.rel (%p221) target = $region32
        $region31: #{tpu_custom_call.1} parent=11 // pred_region
          _
        $region32: #{tpu_custom_call.1} parent=11 // pred_fallthru
          _
        // Predicated region
        $region33: #{tpu_custom_call.1} parent=11 // pred_check
          %p224 = pneg %p168
        $region34: #{tpu_custom_call.1} parent=11 // pred_check_branch
          %226 = sbr.rel (%p224) target = $region36
        $region35: #{tpu_custom_call.1} parent=11 // pred_region
          _
        $region36: #{tpu_custom_call.1} parent=11 // pred_fallthru
          _
      $region12: #{tpu_custom_call.1} parent=5 // pred_fallthru
        _
      %p227 = scmp.lt.s32.totalorder %s16, 2
      // Predicated region
      $region37: #{tpu_custom_call.1} parent=5 // pred_check
        %p228 = pneg %p227
      $region38: #{tpu_custom_call.1} parent=5 // pred_check_branch
        %230 = sbr.rel (%p228) target = $region40
      $region39: #{tpu_custom_call.1} parent=5 // pred_region
        // Predicated region
        $region41: #{tpu_custom_call.1} parent=39 // pred_check
          %p231 = pneg %p36
        $region42: #{tpu_custom_call.1} parent=39 // pred_check_branch
          %233 = sbr.rel (%p231) target = $region44
        $region43: #{tpu_custom_call.1} parent=39 // pred_region
          %p234 = scmp.lt.s32.totalorder %s16, 1
          %s235 = scalar_select %p234, %s16, 1
          %s236 = smul.addr %s235, 8
          %s237 = scalar_lea.vmem %s0, %s236
        $region44: #{tpu_custom_call.1} parent=39 // pred_fallthru
          _
      $region40: #{tpu_custom_call.1} parent=5 // pred_fallthru
        _
      %p238 = scmp.le.s32.totalorder 1, %s16
      %p239 = scmp.lt.s32.totalorder %s16, 3
      %p240 = pnand %p238, %p239
      %p241 = pneg %p240
      // Predicated region
      $region45: #{tpu_custom_call.1} parent=5 // pred_check
        _
      $region46: #{tpu_custom_call.1} parent=5 // pred_check_branch
        %243 = sbr.rel (%p240) target = $region48
      $region47: #{tpu_custom_call.1} parent=5 // pred_region
        %s244 = ssub.s32 %s16, 1
        %p245 = scmp.lt.s32.totalorder %s21, 1
        %s246 = scalar_select %p245, %s21, 1
        %s247 = smul.addr %s246, 8
        %s248 = scalar_lea.vmem %s0, %s247
        %p249 = pneg %p42
        %p250 = pneg %p39
        %p251 = pneg %p63
        %p252 = pneg %p60
        %p253 = pneg %p84
        %p254 = pneg %p81
        %p255 = pneg %p105
        %p256 = pneg %p102
        %p257 = pneg %p126
        %p258 = pneg %p123
        %p259 = pneg %p147
        %p260 = pneg %p144
        %p261 = pneg %p168
        %p262 = pneg %p165
        %p263 = pneg %p194
        %p264 = pneg %p191
        %s265 = sand.u32 %s181, 1
        %s266 = scalar_lea.sflag [#allocation3], %s265
        %s267 = sand.u32 %s181, 1
        %s268 = smul.addr %s267, 8
        %s269 = scalar_lea.vmem [#allocation2], %s268
        %p270 = scmp.lt.s32.totalorder %s21, 1
        %s271 = scalar_select %p270, %s21, 1
        %s272 = smul.addr %s271, 8
        %s273 = scalar_lea.vmem %s0, %s272
        %v274 = vld [vmem:[%s273] sm:$0xff]
        %v275 = vld [vmem:[%s5] sm:$0x1]
        %v276 = vld [vmem:[%s6] sm:$0x1]
        %v277 = vld [vmem:[%s1] sm:$0xff]
        %v278 = vld [vmem:[%s1 + $0x8] sm:$0xff]
        %v279 = vld [vmem:[%s1 + $0x10] sm:$0xff]
        %v280 = vld [vmem:[%s1 + $0x18] sm:$0xff]
        %v281 = vld [vmem:[%s2] sm:$0x1]
        %v283 = vlaneseq
        %v284 = vshrl.u32 %v283, 7
        %v285 = vsub.s32 0, %v284
        %v286 = vrot.slane %v281, %v285
        %vm288 = vcmask 261120
        %v290 = vsel %vm288, %v274, 0
        %292 = vmatprep.subr.mxu0 0.0
        %293 = vmatpush1.msra.mxu0 %v277
        %294 = vmatprep.subr.mxu0 0.0
        %295 = vmatpush1.msra.mxu0 %v278
        %296 = vmatprep.subr.mxu0 0.0
        %297 = vmatpush1.msra.mxu0 %v279
        %298 = vmatprep.subr.mxu0 0.0
        %299 = vmatpush1.msra.mxu0 %v280
        %300 = vmatprep.subr.mxu0 0.0
        %301 = vmatpush1.msra.mxu0 0.0
        %302 = vmatprep.subr.mxu0 0.0
        %303 = vmatpush1.msra.mxu0 0.0
        %304 = vmatprep.subr.mxu0 0.0
        %305 = vmatpush1.msra.mxu0 0.0
        %306 = vmatprep.subr.mxu0 0.0
        %307 = vmatpush1.msra.mxu0 0.0
        %308 = vmatprep.subr.mxu0 0.0
        %309 = vmatpush1.msra.mxu0 0.0
        %310 = vmatprep.subr.mxu0 0.0
        %311 = vmatpush1.msra.mxu0 0.0
        %312 = vmatprep.subr.mxu0 0.0
        %313 = vmatpush1.msra.mxu0 0.0
        %314 = vmatprep.subr.mxu0 0.0
        %315 = vmatpush1.msra.mxu0 0.0
        %316 = vmatprep.subr.mxu0 0.0
        %317 = vmatpush1.msra.mxu0 0.0
        %318 = vmatprep.subr.mxu0 0.0
        %319 = vmatpush1.msra.mxu0 0.0
        %320 = vmatprep.subr.mxu0 0.0
        %321 = vmatpush1.msra.mxu0 0.0
        %322 = vmatprep.subr.mxu0 0.0
        %323 = vmatpush1.msra.mxu0 0.0
        %324 = vmatprep.subr.mxu0 0.0
        %325 = vmatpush1.msra.mxu0 0.0
        %326 = vmatprep.subr.mxu0 0.0
        %327 = vmatpush1.msra.mxu0 0.0
        %328 = vmatprep.subr.mxu0 0.0
        %329 = vmatpush1.msra.mxu0 0.0
        %330 = vmatprep.subr.mxu0 0.0
        %331 = vmatpush1.msra.mxu0 0.0
        %332 = vmatprep.subr.mxu0 0.0
        %333 = vmatpush1.msra.mxu0 0.0
        %334 = vmatprep.subr.mxu0 0.0
        %335 = vmatpush1.msra.mxu0 0.0
        %336 = vmatprep.subr.mxu0 0.0
        %337 = vmatpush1.msra.mxu0 0.0
        %338 = vmatprep.subr.mxu0 0.0
        %339 = vmatpush1.msra.mxu0 0.0
        %340 = vmatprep.subr.mxu0 0.0
        %341 = vmatpush1.msra.mxu0 0.0
        %342 = vmatprep.subr.mxu0 0.0
        %343 = vmatpush1.msra.mxu0 0.0
        %344 = vmatprep.subr.mxu0 0.0
        %345 = vmatpush1.msra.mxu0 0.0
        %346 = vmatprep.subr.mxu0 0.0
        %347 = vmatpush1.msra.mxu0 0.0
        %348 = vmatprep.subr.mxu0 0.0
        %349 = vmatpush1.msra.mxu0 0.0
        %350 = vmatprep.subr.mxu0 0.0
        %351 = vmatpush1.msra.mxu0 0.0
        %352 = vmatprep.subr.mxu0 0.0
        %353 = vmatpush1.msra.mxu0 0.0
        %354 = vmatprep.subr.mxu0 0.0
        %355 = vmatpush1.msra.mxu0 0.0
        %356 = vmatprep.mubr.f32.mxu0 0.0
        %357 = vmatmul.mubr.f32.gmra.mrb[0].mxu0 %v290
        %v358 = vpop.f32.mrb[0].mxu0
        %v359 = vadd.f32 %v286, %v358
        %v360 = vpop.f32.mrb[0].mxu0
        %361 = vdwg.mxu0
        %v362 = vmax.f32 %v359, 0.0
        %v363 = vld [vmem:[%s3] sm:$0xff]
        %v364 = vld [vmem:[%s3 + $0x8] sm:$0xff]
        %v365 = vld [vmem:[%s3 + $0x10] sm:$0xff]
        %v366 = vld [vmem:[%s3 + $0x18] sm:$0xff]
        %v367 = vld [vmem:[%s3 + $0x20] sm:$0xff]
        %v368 = vld [vmem:[%s3 + $0x28] sm:$0xff]
        %v369 = vld [vmem:[%s3 + $0x30] sm:$0xff]
        %v370 = vld [vmem:[%s3 + $0x38] sm:$0xff]
        %v371 = vld [vmem:[%s4] sm:$0x1]
        %v373 = vlaneseq
        %v374 = vshrl.u32 %v373, 7
        %v375 = vsub.s32 0, %v374
        %v376 = vrot.slane %v371, %v375
        %vm378 = vcmask 523264
        %v380 = vsel %vm378, %v362, 0
        %382 = vmatprep.subr.mxu0 0.0
        %383 = vmatpush1.msra.mxu0 %v363
        %384 = vmatprep.subr.mxu0 0.0
        %385 = vmatpush1.msra.mxu0 %v364
        %386 = vmatprep.subr.mxu0 0.0
        %387 = vmatpush1.msra.mxu0 %v365
        %388 = vmatprep.subr.mxu0 0.0
        %389 = vmatpush1.msra.mxu0 %v366
        %390 = vmatprep.subr.mxu0 0.0
        %391 = vmatpush1.msra.mxu0 %v367
        %392 = vmatprep.subr.mxu0 0.0
        %393 = vmatpush1.msra.mxu0 %v368
        %394 = vmatprep.subr.mxu0 0.0
        %395 = vmatpush1.msra.mxu0 %v369
        %396 = vmatprep.subr.mxu0 0.0
        %397 = vmatpush1.msra.mxu0 %v370
        %398 = vmatprep.subr.mxu0 0.0
        %399 = vmatpush1.msra.mxu0 0.0
        %400 = vmatprep.subr.mxu0 0.0
        %401 = vmatpush1.msra.mxu0 0.0
        %402 = vmatprep.subr.mxu0 0.0
        %403 = vmatpush1.msra.mxu0 0.0
        %404 = vmatprep.subr.mxu0 0.0
        %405 = vmatpush1.msra.mxu0 0.0
        %406 = vmatprep.subr.mxu0 0.0
        %407 = vmatpush1.msra.mxu0 0.0
        %408 = vmatprep.subr.mxu0 0.0
        %409 = vmatpush1.msra.mxu0 0.0
        %410 = vmatprep.subr.mxu0 0.0
        %411 = vmatpush1.msra.mxu0 0.0
        %412 = vmatprep.subr.mxu0 0.0
        %413 = vmatpush1.msra.mxu0 0.0
        %414 = vmatprep.subr.mxu0 0.0
        %415 = vmatpush1.msra.mxu0 0.0
        %416 = vmatprep.subr.mxu0 0.0
        %417 = vmatpush1.msra.mxu0 0.0
        %418 = vmatprep.subr.mxu0 0.0
        %419 = vmatpush1.msra.mxu0 0.0
        %420 = vmatprep.subr.mxu0 0.0
        %421 = vmatpush1.msra.mxu0 0.0
        %422 = vmatprep.subr.mxu0 0.0
        %423 = vmatpush1.msra.mxu0 0.0
        %424 = vmatprep.subr.mxu0 0.0
        %425 = vmatpush1.msra.mxu0 0.0
        %426 = vmatprep.subr.mxu0 0.0
        %427 = vmatpush1.msra.mxu0 0.0
        %428 = vmatprep.subr.mxu0 0.0
        %429 = vmatpush1.msra.mxu0 0.0
        %430 = vmatprep.subr.mxu0 0.0
        %431 = vmatpush1.msra.mxu0 0.0
        %432 = vmatprep.subr.mxu0 0.0
        %433 = vmatpush1.msra.mxu0 0.0
        %434 = vmatprep.subr.mxu0 0.0
        %435 = vmatpush1.msra.mxu0 0.0
        %436 = vmatprep.subr.mxu0 0.0
        %437 = vmatpush1.msra.mxu0 0.0
        %438 = vmatprep.subr.mxu0 0.0
        %439 = vmatpush1.msra.mxu0 0.0
        %440 = vmatprep.subr.mxu0 0.0
        %441 = vmatpush1.msra.mxu0 0.0
        %442 = vmatprep.subr.mxu0 0.0
        %443 = vmatpush1.msra.mxu0 0.0
        %444 = vmatprep.subr.mxu0 0.0
        %445 = vmatpush1.msra.mxu0 0.0
        %446 = vmatprep.mubr.f32.mxu0 0.0
        %447 = vmatmul.mubr.f32.gmra.mrb[0].mxu0 %v380
        %v448 = vpop.f32.mrb[0].mxu0
        %v449 = vadd.f32 %v376, %v448
        %v450 = vpop.f32.mrb[0].mxu0
        %451 = vdwg.mxu0
        %v452 = vadd.f32 %v274, %v449
        %v453 = vsel %vm288, %v452, 0.0
        %454 = vadd.xlane.f32.xlu0 %v453
        %v455 = vpop.xlane.xlu0 %454
        %v456 = vrcp.pop 32.0
        %v457 = vmul.f32 %v455, %v456
        %v458 = vsub.f32 %v452, %v457
        %v459 = vmul.f32 %v458, %v458
        %v460 = vsel %vm288, %v459, 0.0
        %461 = vadd.xlane.f32.xlu0 %v460
        %v462 = vpop.xlane.xlu0 %461
        %v463 = vmul.f32 %v462, %v456
        %v464 = vadd.f32 %v463, 1e-05
        %v465 = vrsqrt.pop %v464
        %v466 = vmul.f32 %v458, %v465
        %v468 = vlaneseq
        %v469 = vshrl.u32 %v468, 7
        %v470 = vsub.s32 0, %v469
        %v471 = vrot.slane %v275, %v470
        %v473 = vmul.f32 %v466, %v471
        %v475 = vlaneseq
        %v476 = vshrl.u32 %v475, 7
        %v477 = vsub.s32 0, %v476
        %v478 = vrot.slane %v276, %v477
        %v480 = vadd.f32 %v473, %v478
        %481 = vst.msk [vmem:[%s269] sm:$0xff] %vm288, %v480
        %s482 = sand.u32 %s181, 1
        %s483 = scalar_lea.sflag [#allocation3], %s482
        %s484 = sand.u32 %s181, 1
        %s485 = smul.addr %s484, 8
        %s486 = scalar_lea.vmem [#allocation2], %s485
        // Predicated region
        $region49: #{tpu_custom_call.1} parent=47 // pred_check
          %p487 = pneg %p191
        $region50: #{tpu_custom_call.1} parent=47 // pred_check_branch
          %489 = sbr.rel (%p487) target = $region52
        $region51: #{tpu_custom_call.1} parent=47 // pred_region
          %s491 = ssub.s32 128, 128
          %492 = vsyncadd %s483, %s491
          %s493 = smul.addr %s21, 128
          %s494 = scalar_lea.hbm %s7, %s493
          %s496 = sshll.u32 %s486, 4
          %s497 = int_to_ptr.vmem [resolvable:$true] %s496
          %499 = dma.vmem_to_hbm [thread:$0]  %s497, 128, %s494, %s483
        $region52: #{tpu_custom_call.1} parent=47 // pred_fallthru
          _
      $region48: #{tpu_custom_call.1} parent=5 // pred_fallthru
        _
      %p500 = scmp.le.s32.totalorder 2, %s16
      // Predicated region
      $region53: #{tpu_custom_call.1} parent=5 // pred_check
        %p501 = pneg %p500
      $region54: #{tpu_custom_call.1} parent=5 // pred_check_branch
        %503 = sbr.rel (%p501) target = $region56
      $region55: #{tpu_custom_call.1} parent=5 // pred_region
        %s504 = ssub.s32 %s16, 2
        // Predicated region
        $region57: #{tpu_custom_call.1} parent=55 // pred_check
          %p505 = pneg %p197
        $region58: #{tpu_custom_call.1} parent=55 // pred_check_branch
          %507 = sbr.rel (%p505) target = $region60
        $region59: #{tpu_custom_call.1} parent=55 // pred_region
          %s508 = sand.u32 %s182, 1
          %s509 = scalar_lea.sflag [#allocation3], %s508
          %s510 = sand.u32 %s182, 1
          %s511 = smul.addr %s510, 8
          %s512 = scalar_lea.vmem [#allocation2], %s511
          %513 = dma.done %s509, 128
        $region60: #{tpu_custom_call.1} parent=55 // pred_fallthru
          _
      $region56: #{tpu_custom_call.1} parent=5 // pred_fallthru
        _
    $region6: #{tpu_custom_call.1} parent=1 // loop_footer
      %s20 = sadd.s32 1, %s16
    $region7: #{tpu_custom_call.1} parent=1 // loop_footer_branch
      %15 = sbr.rel target = $region3
    $region8: #{tpu_custom_call.1} parent=1 // loop_exit
      _
    %514 = vsyncpa [#allocation3], 1
    %s515 = scalar_lea.sflag [#allocation3], 1
    %516 = vsyncpa %s515, 1

</llo_original>
